<compile_context>
chip_gen: v5e
topology: v5e:2x2
jax: 0.10.0
libtpu: 0.0.40
codegen_flags: <defaults>
</compile_context>

<pallas_src>
import jax
import jax.numpy as jnp
from jax import lax
from jax.experimental import pallas as pl
from jax.experimental.pallas import tpu as pltpu


def _round_up(x, m):
    return ((x + m - 1) // m) * m


def _dqn_mlp_kernel(x_ref, w1_ref, b1_ref, w2t_ref, b2t_ref, out_ref):
    # fc1 on the MXU, f32 accumulation; bias-add + ReLU stay in f32 on the VPU
    # (v5e has no bf16 VPU path and the accumulator is already f32).
    h = jnp.dot(x_ref[...], w1_ref[...], preferred_element_type=jnp.float32)
    h = jnp.maximum(h + b1_ref[...], 0.0)
    # fc2 in NT form: (A, H) x (TB, H) contracted over H -> (A, TB).
    # Batch sits on lanes of the output block -> unmasked, lane-dense writeback.
    out_t = lax.dot_general(
        w2t_ref[...], h.astype(w2t_ref.dtype),
        dimension_numbers=(((1,), (1,)), ((), ())),
        preferred_element_type=jnp.float32)
    out_ref[...] = out_t + b2t_ref[...]


def linear_deep_q_network_forward(state, w1, b1, w2, b2,
                                  *, block_b=512, compute_dtype=jnp.float32):
    """Pallas forward for LinearDeepQNetwork: relu(state @ w1 + b1) @ w2 + b2.

    state: (B, input_dims) f32
    w1: (input_dims, 64) f32,  b1: (1, 64) f32
    w2: (64, n_actions) f32,   b2: (1, n_actions) f32
    compute_dtype: jnp.float32 or jnp.bfloat16 (matmul inputs only; accumulation,
                   bias adds and ReLU stay f32).
    returns: (B, n_actions) f32
    """
    B, D = state.shape
    H = w1.shape[1]
    A = w2.shape[1]

    # Sublane-align the batch tile (8 rows for f32 inputs, 16 for bf16) so MXU
    # pushes and stores are full, unmasked vregs; the pad is sliced off at the end.
    sublane = 8 * (4 // jnp.dtype(compute_dtype).itemsize)
    if B <= block_b:
        tb = _round_up(B, sublane)        # single tile covering the padded batch
    else:
        tb = _round_up(block_b, 128)      # multi-tile: lane/sublane aligned
    b_pad = _round_up(B, tb)
    num_tiles = b_pad // tb

    x = state.astype(compute_dtype)
    if b_pad != B:
        x = jnp.pad(x, ((0, b_pad - B), (0, 0)))
    w1c = w1.astype(compute_dtype)
    w2t = jnp.transpose(w2).astype(compute_dtype)       # (A, H)
    b1c = b1.astype(jnp.float32)                        # (1, H)
    b2t = jnp.reshape(b2, (A, 1)).astype(jnp.float32)   # (A, 1), lane-broadcast in kernel

    out_t = pl.pallas_call(
        _dqn_mlp_kernel,
        out_shape=jax.ShapeDtypeStruct((A, b_pad), jnp.float32),
        grid=(num_tiles,),
        in_specs=[
            # state tile streams across the grid (auto double-buffered)
            pl.BlockSpec((tb, D), lambda i: (i, 0)),
            # weights / biases: constant index_map -> single DMA, VMEM-resident
            pl.BlockSpec((D, H), lambda i: (0, 0)),
            pl.BlockSpec((1, H), lambda i: (0, 0)),
            pl.BlockSpec((A, H), lambda i: (0, 0)),
            pl.BlockSpec((A, 1), lambda i: (0, 0)),
        ],
        out_specs=pl.BlockSpec((A, tb), lambda i: (0, i)),
        compiler_params=pltpu.CompilerParams(
            # batch tiles are independent -> shard across TensorCores on v7x
            dimension_semantics=("parallel",)),
    )(x, w1c, b1c, w2t, b2t)

    # (A, b_pad) -> (B, A); transpose + tail slice are cheap XLA ops outside the kernel.
    return out_t.T[:B]


def _init_params(key, input_dims, n_actions, hidden=64):
    """Mimics PyTorch nn.Linear default init: U(-1/sqrt(fan_in), 1/sqrt(fan_in))."""
    k1, k2, k3, k4 = jax.random.split(key, 4)
    bound1 = 1.0 / jnp.sqrt(jnp.float32(input_dims))
    bound2 = 1.0 / jnp.sqrt(jnp.float32(hidden))
    w1 = jax.random.uniform(k1, (input_dims, hidden), jnp.float32, -bound1, bound1)
    b1 = jax.random.uniform(k2, (1, hidden), jnp.float32, -bound1, bound1)
    w2 = jax.random.uniform(k3, (hidden, n_actions), jnp.float32, -bound2, bound2)
    b2 = jax.random.uniform(k4, (1, n_actions), jnp.float32, -bound2, bound2)
    return w1, b1, w2, b2


def _reference(state, w1, b1, w2, b2):
    return jnp.maximum(state @ w1 + b1, 0.0) @ w2 + b2


# TODO(synk): optimizer (Adam), MSELoss and device placement from the PyTorch
# module are training/host-side plumbing, not part of the forward pass.

if __name__ == "__main__":
    key = jax.random.PRNGKey(0)
    input_dims = 8
    n_actions = 4
    pkey, xkey1, xkey2 = jax.random.split(key, 3)
    w1, b1, w2, b2 = _init_params(pkey, input_dims, n_actions)

    # 1) Small single-tile case (original module usage), f32, strict check.
    state_small = jax.random.normal(xkey1, (2, input_dims), jnp.float32)
    out_small = jax.block_until_ready(
        linear_deep_q_network_forward(state_small, w1, b1, w2, b2))
    ref_small = _reference(state_small, w1, b1, w2, b2)
    assert out_small.shape == (2, n_actions)
    assert jnp.allclose(out_small, ref_small, atol=1e-5, rtol=1e-5)

    # 2) Replay-buffer-sized batch: multi-tile grid, weights stay VMEM-resident.
    state_big = jax.random.normal(xkey2, (300, input_dims), jnp.float32)
    out_big = jax.block_until_ready(
        linear_deep_q_network_forward(state_big, w1, b1, w2, b2, block_b=128))
    ref_big = _reference(state_big, w1, b1, w2, b2)
    assert out_big.shape == (300, n_actions)
    assert jnp.allclose(out_big, ref_big, atol=1e-5, rtol=1e-5)

    # 3) bf16 matmul inputs with f32 accumulation (native MXU path on v6e/v7x).
    out_bf16 = jax.block_until_ready(
        linear_deep_q_network_forward(state_big, w1, b1, w2, b2,
                                      block_b=128, compute_dtype=jnp.bfloat16))
    assert jnp.allclose(out_bf16, ref_big, atol=5e-2, rtol=5e-2)

    print("KERNEL_OK")
</pallas_src>

<mosaic_0001>
module attributes {stable_mosaic.version = 11 : i64} {
  func.func @_dqn_mlp_kernel(%arg0: i32, %arg1: memref<8x8xf32, #tpu.memory_space<vmem>>, %arg2: memref<8x64xf32, #tpu.memory_space<vmem>>, %arg3: memref<1x64xf32, #tpu.memory_space<vmem>>, %arg4: memref<4x64xf32, #tpu.memory_space<vmem>>, %arg5: memref<4x1xf32, #tpu.memory_space<vmem>>, %arg6: memref<4x8xf32, #tpu.memory_space<vmem>>) attributes {dimension_semantics = [#tpu.dimension_semantics<parallel>], iteration_bounds = array<i64: 1>, scalar_prefetch = 0 : i64, scratch_operands = 0 : i64, tpu.core_type = #tpu.core_type<tc>, window_params = [{transform_indices = @transform_0, window_bounds = array<i64: 8, 8>}, {pipeline_mode = #tpu.pipeline_mode<synchronous>, transform_indices = @transform_1, window_bounds = array<i64: 8, 64>}, {pipeline_mode = #tpu.pipeline_mode<synchronous>, transform_indices = @transform_2, window_bounds = array<i64: 1, 64>}, {pipeline_mode = #tpu.pipeline_mode<synchronous>, transform_indices = @transform_3, window_bounds = array<i64: 4, 64>}, {pipeline_mode = #tpu.pipeline_mode<synchronous>, transform_indices = @transform_4, window_bounds = array<i64: 4, 1>}, {transform_indices = @transform_5, window_bounds = array<i64: 4, 8>}]} {
    %c0 = arith.constant 0 : index
    %c0_0 = arith.constant 0 : index
    %0 = vector.load %arg1[%c0, %c0_0] : memref<8x8xf32, #tpu.memory_space<vmem>>, vector<8x8xf32>
    %c0_1 = arith.constant 0 : index
    %c0_2 = arith.constant 0 : index
    %1 = vector.load %arg2[%c0_1, %c0_2] : memref<8x64xf32, #tpu.memory_space<vmem>>, vector<8x64xf32>
    %cst = arith.constant dense<0.000000e+00> : vector<8x64xf32>
    %2 = tpu.matmul %0, %1, %cst {dimension_numbers = #tpu.dot_dimension_numbers<[1], [0], [0], [1], [0, 0, 1, 1], [], []>} : vector<8x8xf32>, vector<8x64xf32>, vector<8x64xf32> -> vector<8x64xf32>
    %c0_3 = arith.constant 0 : index
    %c0_4 = arith.constant 0 : index
    %3 = vector.load %arg3[%c0_3, %c0_4] : memref<1x64xf32, #tpu.memory_space<vmem>>, vector<1x64xf32>
    %4 = vector.broadcast %3 : vector<1x64xf32> to vector<8x64xf32>
    %5 = arith.addf %2, %4 : vector<8x64xf32>
    %cst_5 = arith.constant 0.000000e+00 : f32
    %6 = vector.broadcast %cst_5 : f32 to vector<8x64xf32>
    %7 = arith.maximumf %5, %6 : vector<8x64xf32>
    %c0_6 = arith.constant 0 : index
    %c0_7 = arith.constant 0 : index
    %8 = vector.load %arg4[%c0_6, %c0_7] : memref<4x64xf32, #tpu.memory_space<vmem>>, vector<4x64xf32>
    %cst_8 = arith.constant dense<0.000000e+00> : vector<4x8xf32>
    %9 = tpu.matmul %8, %7, %cst_8 {dimension_numbers = #tpu.dot_dimension_numbers<[1], [1], [0], [0], [0, 0, 1, 0], [], []>} : vector<4x64xf32>, vector<8x64xf32>, vector<4x8xf32> -> vector<4x8xf32>
    %c0_9 = arith.constant 0 : index
    %c0_10 = arith.constant 0 : index
    %10 = vector.load %arg5[%c0_9, %c0_10] : memref<4x1xf32, #tpu.memory_space<vmem>>, vector<4x1xf32>
    %11 = vector.broadcast %10 : vector<4x1xf32> to vector<4x8xf32>
    %12 = arith.addf %9, %11 : vector<4x8xf32>
    %c0_11 = arith.constant 0 : index
    %c0_12 = arith.constant 0 : index
    %13 = vector.load %arg6[%c0_11, %c0_12] : memref<4x8xf32, #tpu.memory_space<vmem>>, vector<4x8xf32>
    tpu.vector_store %arg6[%c0_11, %c0_12], %12 {strides = array<i32>} : memref<4x8xf32, #tpu.memory_space<vmem>>, vector<4x8xf32>,
    return
  }
  func.func @transform_0(%arg0: i32) -> (i32, i32) {
    %c0_i32 = arith.constant 0 : i32
    %c0_i32_0 = arith.constant 0 : i32
    return %arg0, %c0_i32 : i32, i32
  }
  func.func @transform_1(%arg0: i32) -> (i32, i32) {
    %c0_i32 = arith.constant 0 : i32
    %c0_i32_0 = arith.constant 0 : i32
    %c0_i32_1 = arith.constant 0 : i32
    return %c0_i32, %c0_i32_0 : i32, i32
  }
  func.func @transform_2(%arg0: i32) -> (i32, i32) {
    %c0_i32 = arith.constant 0 : i32
    %c0_i32_0 = arith.constant 0 : i32
    %c0_i32_1 = arith.constant 0 : i32
    return %c0_i32, %c0_i32_0 : i32, i32
  }
  func.func @transform_3(%arg0: i32) -> (i32, i32) {
    %c0_i32 = arith.constant 0 : i32
    %c0_i32_0 = arith.constant 0 : i32
    %c0_i32_1 = arith.constant 0 : i32
    return %c0_i32, %c0_i32_0 : i32, i32
  }
  func.func @transform_4(%arg0: i32) -> (i32, i32) {
    %c0_i32 = arith.constant 0 : i32
    %c0_i32_0 = arith.constant 0 : i32
    %c0_i32_1 = arith.constant 0 : i32
    return %c0_i32, %c0_i32_0 : i32, i32
  }
  func.func @transform_5(%arg0: i32) -> (i32, i32) {
    %c0_i32 = arith.constant 0 : i32
    %c0_i32_0 = arith.constant 0 : i32
    return %c0_i32, %arg0 : i32, i32
  }
}

</mosaic_0001>

<llo_original>
// kernel: tpu_custom_call.1
$region0: #{tpu_custom_call.1}
  #allocation0 [shape = 'u32[]', space=smem, size = 0x4, offset = 0x4, fixed_abs, tag = 'smem constant byte address 0x4 - core index']
  #allocation1 [shape = 'u32[72,128]{1,0:T(1,128)}', space=vmem, size = 0x9000, scoped, tag = 'internal scratch']
  %s0 = inlined_call_operand.hbm [shape: f32[8,8], index: 0, kind: input, shape index: {}]
  %s1 = inlined_call_operand.hbm [shape: f32[8,64], index: 1, kind: input, shape index: {}]
  %s2 = inlined_call_operand.vmem [shape: f32[1,64], index: 2, kind: input, shape index: {}]
  %s3 = inlined_call_operand.vmem [shape: f32[4,64], index: 3, kind: input, shape index: {}]
  %s4 = inlined_call_operand.vmem [shape: f32[4,1], index: 4, kind: input, shape index: {}]
  %s5 = inlined_call_operand.hbm [shape: f32[4,8], index: 5, kind: output, shape index: {}]
  %s6 = sld [smem:[#allocation0]]
  $region38: #{tpu_custom_call.1} parent=0
    _
  %s8 = ssub.s32 1, %s6
  %s9 = scalar_select 0, %s8, %s6
  $region1: #{tpu_custom_call.1} parent=0
    #allocation2 [shape = 'u8[4096]{0}', space=vmem, size = 0x1000, scoped, tag = 'input window, operand 0, single buffered']
    #allocation3 [shape = 's32[1]{0}', space=sflag, size = 0x4, scoped, tag = 'scoped memory for tpu_custom_call.1']
    #allocation4 [shape = 's32[1]{0}', space=sflag, size = 0x4, scoped, tag = 'scoped memory for tpu_custom_call.1']
    #allocation5 [shape = 'u8[4096]{0}', space=vmem, size = 0x1000, scoped, tag = 'input window, operand 1, single buffered']
    #allocation6 [shape = 's32[1]{0}', space=sflag, size = 0x4, scoped, tag = 'scoped memory for tpu_custom_call.1']
    #allocation7 [shape = 'u8[2048]{0}', space=vmem, size = 0x800, scoped, tag = 'output window, operand 0, single buffered']
    %10 = vsyncpa [#allocation3], 0
    %11 = vsyncpa [#allocation6], 0
    %12 = vsyncpa [#allocation4], 0
    // Predicated region
    $region2: #{tpu_custom_call.1} parent=1 // pred_check
      _
    $region3: #{tpu_custom_call.1} parent=1 // pred_check_branch
      %14 = sbr.rel (0) target = $region5
    $region4: #{tpu_custom_call.1} parent=1 // pred_region
      %16 = vsyncadd [#allocation3], 0
      %s18 = sshll.u32 %s0, 4
      %s19 = int_to_ptr.hbm [resolvable:$true] %s18
      %s20 = sshll.u32 [#allocation2], 4
      %s21 = int_to_ptr.vmem [resolvable:$true] %s20
      %23 = dma.hbm_to_vmem [thread:$0]  %s19, 128, %s21, [#allocation3]
    $region5: #{tpu_custom_call.1} parent=1 // pred_fallthru
      _
    // Predicated region
    $region6: #{tpu_custom_call.1} parent=1 // pred_check
      _
    $region7: #{tpu_custom_call.1} parent=1 // pred_check_branch
      %25 = sbr.rel (0) target = $region9
    $region8: #{tpu_custom_call.1} parent=1 // pred_region
      %27 = vsyncadd [#allocation6], 0
      %s29 = sshll.u32 %s1, 4
      %s30 = int_to_ptr.hbm [resolvable:$true] %s29
      %s31 = sshll.u32 [#allocation5], 4
      %s32 = int_to_ptr.vmem [resolvable:$true] %s31
      %34 = dma.hbm_to_vmem [thread:$0]  %s30, 128, %s32, [#allocation6]
    $region9: #{tpu_custom_call.1} parent=1 // pred_fallthru
      _
    // Predicated region
    $region10: #{tpu_custom_call.1} parent=1 // pred_check
      _
    $region11: #{tpu_custom_call.1} parent=1 // pred_check_branch
      %36 = sbr.rel (0) target = $region13
    $region12: #{tpu_custom_call.1} parent=1 // pred_region
      _
    $region13: #{tpu_custom_call.1} parent=1 // pred_fallthru
      _
    // Predicated region
    $region14: #{tpu_custom_call.1} parent=1 // pred_check
      _
    $region15: #{tpu_custom_call.1} parent=1 // pred_check_branch
      %38 = sbr.rel (0) target = $region17
    $region16: #{tpu_custom_call.1} parent=1 // pred_region
      _
    $region17: #{tpu_custom_call.1} parent=1 // pred_fallthru
      _
    // Predicated region
    $region18: #{tpu_custom_call.1} parent=1 // pred_check
      _
    $region19: #{tpu_custom_call.1} parent=1 // pred_check_branch
      %40 = sbr.rel (0) target = $region21
    $region20: #{tpu_custom_call.1} parent=1 // pred_region
      _
    $region21: #{tpu_custom_call.1} parent=1 // pred_fallthru
      _
    // Predicated region
    $region22: #{tpu_custom_call.1} parent=1 // pred_check
      _
    $region23: #{tpu_custom_call.1} parent=1 // pred_check_branch
      %42 = sbr.rel (0) target = $region25
    $region24: #{tpu_custom_call.1} parent=1 // pred_region
      %44 = dma.done [#allocation3], 128
    $region25: #{tpu_custom_call.1} parent=1 // pred_fallthru
      _
    // Predicated region
    $region26: #{tpu_custom_call.1} parent=1 // pred_check
      _
    $region27: #{tpu_custom_call.1} parent=1 // pred_check_branch
      %46 = sbr.rel (0) target = $region29
    $region28: #{tpu_custom_call.1} parent=1 // pred_region
      %48 = dma.done [#allocation6], 128
    $region29: #{tpu_custom_call.1} parent=1 // pred_fallthru
      _
    %v49 = vld [vmem:[#allocation2] sm:$0xff]
    %v50 = vld [vmem:[#allocation5] sm:$0xff]
    %v51 = vld [vmem:[%s2] sm:$0x1]
    %v53 = vperm.slane %v51, 0
    %vm55 = vcmask 64512
    %v57 = vsel %vm55, %v49, 0
    %59 = vmatpush.msra.mxu0 0.0
    %60 = vmatpush.msra.mxu0 0.0
    %61 = vmatpush.msra.mxu0 0.0
    %62 = vmatpush.msra.mxu0 0.0
    %63 = vmatpush.msra.mxu0 0.0
    %64 = vmatpush.msra.mxu0 0.0
    %65 = vmatpush.msra.mxu0 0.0
    %66 = vmatpush.msra.mxu0 0.0
    %67 = vmatpush.msra.mxu0 0.0
    %68 = vmatpush.msra.mxu0 0.0
    %69 = vmatpush.msra.mxu0 0.0
    %70 = vmatpush.msra.mxu0 0.0
    %71 = vmatpush.msra.mxu0 0.0
    %72 = vmatpush.msra.mxu0 0.0
    %73 = vmatpush.msra.mxu0 0.0
    %74 = vmatpush.msra.mxu0 %v50
    %75 = vmatmul.f32.gmra.mxu0 %v57
    %v76 = vpop.f32.mrf.mxu0
    %v77 = vadd.f32 %v53, %v76
    %78 = vdwg.mxu0
    %v79 = vmax.f32 %v77, 0.0
    %v80 = vld [vmem:[%s3] sm:$0xf]
    %v81 = vld [vmem:[%s4] sm:$0xf]
    %83 = vset.pattern.permute.xlu0 0
    %84 = vperm.xlu0 %83, %v81
    %v85 = vpop.permute.xlu0 %84
    %vm87 = vcmask 523264
    %v89 = vsel %vm87, %v80, 0
    %v92 = vsel %vm87, %v79, 0
    %94 = vmatpush.xpose.msra.mxu0 0.0
    %95 = vmatpush.xpose.msra.mxu0 0.0
    %96 = vmatpush.xpose.msra.mxu0 0.0
    %97 = vmatpush.xpose.msra.mxu0 0.0
    %98 = vmatpush.xpose.msra.mxu0 0.0
    %99 = vmatpush.xpose.msra.mxu0 0.0
    %100 = vmatpush.xpose.msra.mxu0 0.0
    %101 = vmatpush.xpose.msra.mxu0 0.0
    %102 = vmatpush.xpose.msra.mxu0 0.0
    %103 = vmatpush.xpose.msra.mxu0 0.0
    %104 = vmatpush.xpose.msra.mxu0 0.0
    %105 = vmatpush.xpose.msra.mxu0 0.0
    %106 = vmatpush.xpose.msra.mxu0 0.0
    %107 = vmatpush.xpose.msra.mxu0 0.0
    %108 = vmatpush.xpose.msra.mxu0 0.0
    %109 = vmatpush.xpose.msra.mxu0 %v92
    %110 = vmatmul.f32.gmra.mxu0 %v89
    %v111 = vpop.f32.mrf.mxu0
    %v112 = vadd.f32 %v85, %v111
    %113 = vdwg.mxu0
    %vm114 = vcmask 60416
    %115 = vst.msk [vmem:[#allocation7] sm:$0xf] %vm114, %v112
    // Predicated region
    $region30: #{tpu_custom_call.1} parent=1 // pred_check
      _
    $region31: #{tpu_custom_call.1} parent=1 // pred_check_branch
      %117 = sbr.rel (0) target = $region33
    $region32: #{tpu_custom_call.1} parent=1 // pred_region
      %119 = vsyncadd [#allocation4], 0
      %s121 = sshll.u32 [#allocation7], 4
      %s122 = int_to_ptr.vmem [resolvable:$true] %s121
      %s123 = sshll.u32 %s5, 4
      %s124 = int_to_ptr.hbm [resolvable:$true] %s123
      %126 = dma.vmem_to_hbm [thread:$0]  %s122, 64, %s124, [#allocation4]
    $region33: #{tpu_custom_call.1} parent=1 // pred_fallthru
      _
    // Predicated region
    $region34: #{tpu_custom_call.1} parent=1 // pred_check
      _
    $region35: #{tpu_custom_call.1} parent=1 // pred_check_branch
      %128 = sbr.rel (0) target = $region37
    $region36: #{tpu_custom_call.1} parent=1 // pred_region
      %130 = dma.done [#allocation4], 64
    $region37: #{tpu_custom_call.1} parent=1 // pred_fallthru
      _
    %131 = vsyncpa [#allocation3], 1
    %132 = vsyncpa [#allocation6], 1
    %133 = vsyncpa [#allocation4], 1

</llo_original>
